<compile_context>
chip_gen: v5e
topology: v5e:2x2
jax: 0.10.0
libtpu: 0.0.40
codegen_flags: <defaults>
</compile_context>

<pallas_src>
import jax
import jax.numpy as jnp
from jax.experimental import pallas as pl
from jax.experimental.pallas import tpu as pltpu

PCA_COMPONENTS = 32   # config.PCA_COMPONENTS
H1, H2, H3, OUT = 128, 64, 32, 2
BN_EPS = 1e-5
LANE = 128            # lane-dense width used for the hidden-layer tiles
OUT_PAD = 8           # narrow, lane-legal output width (only first 2 lanes are real)


def _round_up(x, m):
    return ((x + m - 1) // m) * m


def mlp_kernel(x_ref, w_ref, b_ref, o_ref):
    # x_ref: (block_m, 32)       raw PCA features (no padding)
    # w_ref: (4, 128, 128)       stacked, zero-padded, BN-folded weights (stored (in,out))
    # b_ref: (4, 128)            stacked, zero-padded, BN-folded biases
    # o_ref: (block_m, 8)        narrow output slab; lanes 0..1 are the logits
    x = x_ref[...]

    # Layer 1: Linear(32,128) [BN folded] + LeakyReLU(0.2); Dropout(0.3) eval = id.
    # Contract only the 32 real rows of the padded weight tile (K=32 matmul).
    h = jnp.dot(x, w_ref[0, :PCA_COMPONENTS, :],
                preferred_element_type=jnp.float32) + b_ref[0:1, :]
    h = jnp.where(h > 0, h, 0.2 * h)

    # Layer 2: Linear(128,64) [BN folded] + ReLU; Dropout(0.2) eval = id.
    # (columns 64..127 are zero-padded weights/bias -> stay exactly 0 after ReLU)
    h = jnp.dot(h, w_ref[1], preferred_element_type=jnp.float32) + b_ref[1:2, :]
    h = jnp.maximum(h, 0.0)

    # Layer 3: Linear(64,32) + ReLU (padded columns stay 0).
    h = jnp.dot(h, w_ref[2], preferred_element_type=jnp.float32) + b_ref[2:3, :]
    h = jnp.maximum(h, 0.0)

    # Layer 4: Linear(32,2); compute lane-dense, store only the first 8 lanes.
    out = jnp.dot(h, w_ref[3], preferred_element_type=jnp.float32) + b_ref[3:4, :]
    o_ref[...] = out[:, :OUT_PAD].astype(o_ref.dtype)

    # TODO(synk): training-mode Dropout / batch-statistic BatchNorm not implemented
    # (forward here matches PyTorch .eval() semantics).


def _pack_params(params):
    """Fold BatchNorm (eval) into the preceding Linears, pad to 128 lanes, and stack
    into one weight block (4,128,128) and one bias block (4,128)."""
    (w1, b1, g1, be1, m1, v1,
     w2, b2, g2, be2, m2, v2,
     w3, b3, w4, b4) = params

    s1 = g1 * jax.lax.rsqrt(v1 + BN_EPS)          # (1, 128)
    w1f = w1 * s1                                  # (32, 128)
    b1f = (b1 - m1) * s1 + be1                     # (1, 128)

    s2 = g2 * jax.lax.rsqrt(v2 + BN_EPS)           # (1, 64)
    w2f = w2 * s2                                  # (128, 64)
    b2f = (b2 - m2) * s2 + be2                     # (1, 64)

    def pad_w(w):
        r, c = w.shape
        return jnp.pad(w, ((0, LANE - r), (0, LANE - c)))

    def pad_b(b):
        v = b.reshape(-1)
        return jnp.pad(v, (0, LANE - v.shape[0]))

    W = jnp.stack([pad_w(w1f), pad_w(w2f), pad_w(w3), pad_w(w4)]).astype(jnp.float32)
    B = jnp.stack([pad_b(b1f), pad_b(b2f), pad_b(b3), pad_b(b4)]).astype(jnp.float32)
    return W, B


def classic_model_forward(x, params, *, block_m=1024):
    N, F = x.shape
    assert F == PCA_COMPONENTS

    W, B = _pack_params(params)

    # Row tile: as big as possible, but keep >= ~4 grid steps when N permits so the
    # pipeline overlaps DMA/compute and v7x can shard the "parallel" axis over 2 TCs.
    target = _round_up(-(-N // 4), 8)              # round_up(ceil(N/4), 8)
    block_m = max(8, min(block_m, target))
    grid_m = -(-N // block_m)                      # cdiv; last block is ragged

    out = pl.pallas_call(
        mlp_kernel,
        out_shape=jax.ShapeDtypeStruct((N, OUT_PAD), jnp.float32),
        grid_spec=pltpu.PrefetchScalarGridSpec(
            num_scalar_prefetch=0,
            grid=(grid_m,),
            in_specs=[
                # raw (N, 32) input: 32 == full last dim, block rows multiple of 8
                pl.BlockSpec((block_m, PCA_COMPONENTS), lambda i: (i, 0)),
                # constant-index param blocks (fetched once by the pipeline)
                pl.BlockSpec((4, LANE, LANE), lambda i: (0, 0, 0)),
                pl.BlockSpec((4, LANE), lambda i: (0, 0)),
            ],
            out_specs=pl.BlockSpec((block_m, OUT_PAD), lambda i: (i, 0)),
        ),
        compiler_params=pltpu.CompilerParams(
            dimension_semantics=("parallel",),
            vmem_limit_bytes=32 * 1024 * 1024,
        ),
    )(x.astype(jnp.float32), W, B)

    return out[:, :OUT]


def init_params(key):
    """Deterministic init mirroring the PyTorch module's shapes.
    Linear weights are stored transposed: (in, out)."""
    ks = jax.random.split(key, 8)

    def linear(kw, kb, fin, fout):
        bound = 1.0 / jnp.sqrt(fin)
        w = jax.random.uniform(kw, (fin, fout), jnp.float32, -bound, bound)
        b = jax.random.uniform(kb, (1, fout), jnp.float32, -bound, bound)
        return w, b

    w1, b1 = linear(ks[0], ks[1], PCA_COMPONENTS, H1)
    w2, b2 = linear(ks[2], ks[3], H1, H2)
    w3, b3 = linear(ks[4], ks[5], H2, H3)
    w4, b4 = linear(ks[6], ks[7], H3, OUT)

    def bn(feat, kseed):
        gamma = jnp.ones((1, feat), jnp.float32)
        beta = jnp.zeros((1, feat), jnp.float32)
        # non-trivial running stats so BN actually does something
        mean = 0.1 * jax.random.normal(jax.random.PRNGKey(kseed), (1, feat), jnp.float32)
        var = jnp.ones((1, feat), jnp.float32) + 0.05 * jnp.abs(
            jax.random.normal(jax.random.PRNGKey(kseed + 1), (1, feat), jnp.float32))
        return gamma, beta, mean, var

    g1, be1, m1, v1 = bn(H1, 100)
    g2, be2, m2, v2 = bn(H2, 200)

    return (w1, b1, g1, be1, m1, v1,
            w2, b2, g2, be2, m2, v2,
            w3, b3,
            w4, b4)


def reference_forward(x, params):
    (w1, b1, g1, be1, m1, v1,
     w2, b2, g2, be2, m2, v2,
     w3, b3, w4, b4) = params
    h = x @ w1 + b1
    h = (h - m1) * jax.lax.rsqrt(v1 + BN_EPS) * g1 + be1
    h = jnp.where(h > 0, h, 0.2 * h)
    h = h @ w2 + b2
    h = (h - m2) * jax.lax.rsqrt(v2 + BN_EPS) * g2 + be2
    h = jnp.maximum(h, 0.0)
    h = jnp.maximum(h @ w3 + b3, 0.0)
    return h @ w4 + b4


if __name__ == "__main__":
    key = jax.random.PRNGKey(0)
    kx, kp = jax.random.split(key)

    # Small, non-multiple batch to exercise the ragged tail block + multi-step grid.
    N = 200
    x = jax.random.normal(kx, (N, PCA_COMPONENTS), jnp.float32)
    params = init_params(kp)

    out = classic_model_forward(x, params)
    out = jax.block_until_ready(out)

    ref = reference_forward(x, params)
    assert out.shape == (N, OUT)
    assert jnp.allclose(out, ref, atol=1e-4, rtol=1e-4), "mismatch vs reference"

    print("KERNEL_OK")
</pallas_src>

<mosaic_0001>
module attributes {stable_mosaic.version = 11 : i64} {
  func.func @mlp_kernel(%arg0: i32, %arg1: memref<56x32xf32, #tpu.memory_space<vmem>>, %arg2: memref<4x128x128xf32, #tpu.memory_space<vmem>>, %arg3: memref<4x128xf32, #tpu.memory_space<vmem>>, %arg4: memref<56x8xf32, #tpu.memory_space<vmem>>) attributes {dimension_semantics = [#tpu.dimension_semantics<parallel>], iteration_bounds = array<i64: 4>, scalar_prefetch = 0 : i64, scratch_operands = 0 : i64, tpu.core_type = #tpu.core_type<tc>, window_params = [{transform_indices = @transform_0, window_bounds = array<i64: 56, 32>}, {pipeline_mode = #tpu.pipeline_mode<synchronous>, transform_indices = @transform_1, window_bounds = array<i64: 4, 128, 128>}, {pipeline_mode = #tpu.pipeline_mode<synchronous>, transform_indices = @transform_2, window_bounds = array<i64: 4, 128>}, {transform_indices = @transform_3, window_bounds = array<i64: 56, 8>}]} {
    %c0 = arith.constant 0 : index
    %c0_0 = arith.constant 0 : index
    %0 = vector.load %arg1[%c0, %c0_0] : memref<56x32xf32, #tpu.memory_space<vmem>>, vector<56x32xf32>
    %c0_1 = arith.constant 0 : index
    %c0_2 = arith.constant 0 : index
    %c0_3 = arith.constant 0 : index
    %1 = vector.load %arg2[%c0_1, %c0_2, %c0_3] : memref<4x128x128xf32, #tpu.memory_space<vmem>>, vector<1x32x128xf32>
    %2 = vector.shape_cast %1 : vector<1x32x128xf32> to vector<32x128xf32>
    %cst = arith.constant dense<0.000000e+00> : vector<56x128xf32>
    %3 = tpu.matmul %0, %2, %cst {dimension_numbers = #tpu.dot_dimension_numbers<[1], [0], [0], [1], [0, 0, 1, 1], [], []>} : vector<56x32xf32>, vector<32x128xf32>, vector<56x128xf32> -> vector<56x128xf32>
    %c0_4 = arith.constant 0 : index
    %c0_5 = arith.constant 0 : index
    %4 = vector.load %arg3[%c0_4, %c0_5] : memref<4x128xf32, #tpu.memory_space<vmem>>, vector<1x128xf32>
    %5 = vector.broadcast %4 : vector<1x128xf32> to vector<56x128xf32>
    %6 = arith.addf %3, %5 : vector<56x128xf32>
    %cst_6 = arith.constant 0.000000e+00 : f32
    %7 = vector.broadcast %cst_6 : f32 to vector<56x128xf32>
    %8 = arith.cmpf ogt, %6, %7 : vector<56x128xf32>
    %cst_7 = arith.constant 2.000000e-01 : f32
    %9 = vector.broadcast %cst_7 : f32 to vector<56x128xf32>
    %10 = arith.mulf %9, %6 : vector<56x128xf32>
    %11 = arith.select %8, %6, %10 : vector<56x128xi1>, vector<56x128xf32>
    %c1 = arith.constant 1 : index
    %c0_8 = arith.constant 0 : index
    %c0_9 = arith.constant 0 : index
    %12 = vector.load %arg2[%c1, %c0_8, %c0_9] : memref<4x128x128xf32, #tpu.memory_space<vmem>>, vector<1x128x128xf32>
    %13 = vector.shape_cast %12 : vector<1x128x128xf32> to vector<128x128xf32>
    %cst_10 = arith.constant dense<0.000000e+00> : vector<56x128xf32>
    %14 = tpu.matmul %11, %13, %cst_10 {dimension_numbers = #tpu.dot_dimension_numbers<[1], [0], [0], [1], [0, 0, 1, 1], [], []>} : vector<56x128xf32>, vector<128x128xf32>, vector<56x128xf32> -> vector<56x128xf32>
    %c1_11 = arith.constant 1 : index
    %c0_12 = arith.constant 0 : index
    %15 = vector.load %arg3[%c1_11, %c0_12] : memref<4x128xf32, #tpu.memory_space<vmem>>, vector<1x128xf32>
    %16 = vector.broadcast %15 : vector<1x128xf32> to vector<56x128xf32>
    %17 = arith.addf %14, %16 : vector<56x128xf32>
    %cst_13 = arith.constant 0.000000e+00 : f32
    %18 = vector.broadcast %cst_13 : f32 to vector<56x128xf32>
    %19 = arith.maximumf %17, %18 : vector<56x128xf32>
    %c2 = arith.constant 2 : index
    %c0_14 = arith.constant 0 : index
    %c0_15 = arith.constant 0 : index
    %20 = vector.load %arg2[%c2, %c0_14, %c0_15] : memref<4x128x128xf32, #tpu.memory_space<vmem>>, vector<1x128x128xf32>
    %21 = vector.shape_cast %20 : vector<1x128x128xf32> to vector<128x128xf32>
    %cst_16 = arith.constant dense<0.000000e+00> : vector<56x128xf32>
    %22 = tpu.matmul %19, %21, %cst_16 {dimension_numbers = #tpu.dot_dimension_numbers<[1], [0], [0], [1], [0, 0, 1, 1], [], []>} : vector<56x128xf32>, vector<128x128xf32>, vector<56x128xf32> -> vector<56x128xf32>
    %c2_17 = arith.constant 2 : index
    %c0_18 = arith.constant 0 : index
    %23 = vector.load %arg3[%c2_17, %c0_18] : memref<4x128xf32, #tpu.memory_space<vmem>>, vector<1x128xf32>
    %24 = vector.broadcast %23 : vector<1x128xf32> to vector<56x128xf32>
    %25 = arith.addf %22, %24 : vector<56x128xf32>
    %cst_19 = arith.constant 0.000000e+00 : f32
    %26 = vector.broadcast %cst_19 : f32 to vector<56x128xf32>
    %27 = arith.maximumf %25, %26 : vector<56x128xf32>
    %c3 = arith.constant 3 : index
    %c0_20 = arith.constant 0 : index
    %c0_21 = arith.constant 0 : index
    %28 = vector.load %arg2[%c3, %c0_20, %c0_21] : memref<4x128x128xf32, #tpu.memory_space<vmem>>, vector<1x128x128xf32>
    %29 = vector.shape_cast %28 : vector<1x128x128xf32> to vector<128x128xf32>
    %cst_22 = arith.constant dense<0.000000e+00> : vector<56x128xf32>
    %30 = tpu.matmul %27, %29, %cst_22 {dimension_numbers = #tpu.dot_dimension_numbers<[1], [0], [0], [1], [0, 0, 1, 1], [], []>} : vector<56x128xf32>, vector<128x128xf32>, vector<56x128xf32> -> vector<56x128xf32>
    %c3_23 = arith.constant 3 : index
    %c0_24 = arith.constant 0 : index
    %31 = vector.load %arg3[%c3_23, %c0_24] : memref<4x128xf32, #tpu.memory_space<vmem>>, vector<1x128xf32>
    %32 = vector.broadcast %31 : vector<1x128xf32> to vector<56x128xf32>
    %33 = arith.addf %30, %32 : vector<56x128xf32>
    %34 = vector.extract_strided_slice %33 {offsets = [0, 0], sizes = [56, 8], strides = [1, 1]} : vector<56x128xf32> to vector<56x8xf32>
    %c0_25 = arith.constant 0 : index
    %c0_26 = arith.constant 0 : index
    %35 = vector.load %arg4[%c0_25, %c0_26] : memref<56x8xf32, #tpu.memory_space<vmem>>, vector<56x8xf32>
    tpu.vector_store %arg4[%c0_25, %c0_26], %34 {strides = array<i32>} : memref<56x8xf32, #tpu.memory_space<vmem>>, vector<56x8xf32>,
    return
  }
  func.func @transform_0(%arg0: i32) -> (i32, i32) {
    %c0_i32 = arith.constant 0 : i32
    %c0_i32_0 = arith.constant 0 : i32
    return %arg0, %c0_i32 : i32, i32
  }
  func.func @transform_1(%arg0: i32) -> (i32, i32, i32) {
    %c0_i32 = arith.constant 0 : i32
    %c0_i32_0 = arith.constant 0 : i32
    %c0_i32_1 = arith.constant 0 : i32
    %c0_i32_2 = arith.constant 0 : i32
    return %c0_i32, %c0_i32_0, %c0_i32_1 : i32, i32, i32
  }
  func.func @transform_2(%arg0: i32) -> (i32, i32) {
    %c0_i32 = arith.constant 0 : i32
    %c0_i32_0 = arith.constant 0 : i32
    %c0_i32_1 = arith.constant 0 : i32
    return %c0_i32, %c0_i32_0 : i32, i32
  }
  func.func @transform_3(%arg0: i32) -> (i32, i32) {
    %c0_i32 = arith.constant 0 : i32
    %c0_i32_0 = arith.constant 0 : i32
    return %arg0, %c0_i32 : i32, i32
  }
}

</mosaic_0001>

<llo_original>
// kernel: tpu_custom_call.1
$region0: #{tpu_custom_call.1}
  #allocation0 [shape = 'u32[]', space=smem, size = 0x4, offset = 0x4, fixed_abs, tag = 'smem constant byte address 0x4 - core index']
  #allocation1 [shape = 'u32[72,128]{1,0:T(1,128)}', space=vmem, size = 0x9000, scoped, tag = 'internal scratch']
  %s0 = inlined_call_operand.vmem [shape: f32[200,32], index: 0, kind: input, shape index: {}]
  %s1 = inlined_call_operand.hbm [shape: f32[4,128,128], index: 1, kind: input, shape index: {}]
  %s2 = inlined_call_operand.vmem [shape: f32[4,128], index: 2, kind: input, shape index: {}]
  %s3 = inlined_call_operand.vmem [shape: f32[200,8], index: 3, kind: output, shape index: {}]
  %s4 = sld [smem:[#allocation0]]
  $region97: #{tpu_custom_call.1} parent=0
    _
  %s6 = ssub.s32 1, %s4
  %s7 = scalar_select 0, %s6, %s4
  $region1: #{tpu_custom_call.1} parent=0
    #allocation2 [shape = 'u8[262144]{0}', space=vmem, size = 0x40000, scoped, tag = 'input window, operand 1, single buffered']
    #allocation3 [shape = 's32[2]{0}', space=sflag, size = 0x8, scoped, tag = 'scoped memory for tpu_custom_call.1']
    #allocation4 [shape = 'u8[57344]{0}', space=vmem, size = 0xe000, scoped, tag = 'output window, operand 0']
    %8 = vsyncpa [#allocation3], 0
    loop: start=0, step=1, limit=6
    $region2: #{tpu_custom_call.1} parent=1 // loop_pre_header
      _
    $region3: #{tpu_custom_call.1} parent=1 // loop_header
      %s10 = sphi 0, %s14
      %p11 = scmp.ge.s32.totalorder %s10, 6
      %s20 = sphi 0, %s22
      %s23 = sphi 0, %s20
      %s24 = sphi 0, %s23
      %s40 = sphi 0, %s24
      %s44 = sphi 0, %s44
      %s46 = sphi 0, %s44
      %s47 = sphi 0, %s46
      %s61 = sphi 0, %s47
      %s65 = sphi 0, %s65
      %s67 = sphi 0, %s65
      %s68 = sphi 0, %s67
      %s82 = sphi 0, %s68
      %s88 = sphi 0, %s90
      %s91 = sphi 0, %s88
      %s92 = sphi 0, %s91
      %s108 = sphi 0, %s92
    $region4: #{tpu_custom_call.1} parent=1 // loop_header_branch
      %13 = sbr.rel (%p11) target = $region8
    $region5: #{tpu_custom_call.1} parent=1 // loop_body
      %s15 = ssub.s32 %s10, 1
      %s16 = ssub.s32 %s10, 2
      %s17 = sadd.s32 %s10, 1
      %s18 = ssub.s32 %s10, %s17
      %p19 = scmp.eq.s32.totalorder %s18, 0
      %s21 = sadd.s32 %s20, 1
      %s22 = scalar_select %p19, %s20, %s21
      %p25 = pneg %p19
      %p26 = scmp.eq.s32.totalorder %s10, 3
      %p27 = por %p25, %p26
      %p28 = scmp.ne.s32.totalorder %s20, %s23
      %p29 = scmp.eq.s32.totalorder %s10, 0
      %p30 = por %p28, %p29
      %p31 = scmp.ne.s32.totalorder %s20, %s23
      %p32 = scmp.eq.s32.totalorder %s15, 3
      %p33 = por %p31, %p32
      %p34 = scmp.ne.s32.totalorder %s23, %s24
      %p35 = scmp.eq.s32.totalorder %s15, 0
      %p36 = por %p34, %p35
      %p37 = scmp.ne.s32.totalorder %s23, %s24
      %p38 = scmp.eq.s32.totalorder %s16, 3
      %p39 = por %p37, %p38
      %p41 = scmp.ne.s32.totalorder %s24, %s40
      %p42 = scmp.eq.s32.totalorder %s16, 0
      %p43 = por %p41, %p42
      %s45 = sadd.s32 %s44, 1
      %p48 = scmp.eq.s32.totalorder %s10, 3
      %p49 = scmp.ne.s32.totalorder %s44, %s46
      %p50 = scmp.eq.s32.totalorder %s10, 0
      %p51 = por %p49, %p50
      %p52 = scmp.ne.s32.totalorder %s44, %s46
      %p53 = scmp.eq.s32.totalorder %s15, 3
      %p54 = por %p52, %p53
      %p55 = scmp.ne.s32.totalorder %s46, %s47
      %p56 = scmp.eq.s32.totalorder %s15, 0
      %p57 = por %p55, %p56
      %p58 = scmp.ne.s32.totalorder %s46, %s47
      %p59 = scmp.eq.s32.totalorder %s16, 3
      %p60 = por %p58, %p59
      %p62 = scmp.ne.s32.totalorder %s47, %s61
      %p63 = scmp.eq.s32.totalorder %s16, 0
      %p64 = por %p62, %p63
      %s66 = sadd.s32 %s65, 1
      %p69 = scmp.eq.s32.totalorder %s10, 3
      %p70 = scmp.ne.s32.totalorder %s65, %s67
      %p71 = scmp.eq.s32.totalorder %s10, 0
      %p72 = por %p70, %p71
      %p73 = scmp.ne.s32.totalorder %s65, %s67
      %p74 = scmp.eq.s32.totalorder %s15, 3
      %p75 = por %p73, %p74
      %p76 = scmp.ne.s32.totalorder %s67, %s68
      %p77 = scmp.eq.s32.totalorder %s15, 0
      %p78 = por %p76, %p77
      %p79 = scmp.ne.s32.totalorder %s67, %s68
      %p80 = scmp.eq.s32.totalorder %s16, 3
      %p81 = por %p79, %p80
      %p83 = scmp.ne.s32.totalorder %s68, %s82
      %p84 = scmp.eq.s32.totalorder %s16, 0
      %p85 = por %p83, %p84
      %s86 = ssub.s32 %s10, %s17
      %p87 = scmp.eq.s32.totalorder %s86, 0
      %s89 = sadd.s32 %s88, 1
      %s90 = scalar_select %p87, %s88, %s89
      %p93 = pneg %p87
      %p94 = scmp.eq.s32.totalorder %s10, 3
      %p95 = por %p93, %p94
      %p96 = scmp.ne.s32.totalorder %s88, %s91
      %p97 = scmp.eq.s32.totalorder %s10, 0
      %p98 = por %p96, %p97
      %p99 = scmp.ne.s32.totalorder %s88, %s91
      %p100 = scmp.eq.s32.totalorder %s15, 3
      %p101 = por %p99, %p100
      %p102 = scmp.ne.s32.totalorder %s91, %s92
      %p103 = scmp.eq.s32.totalorder %s15, 0
      %p104 = por %p102, %p103
      %p105 = scmp.ne.s32.totalorder %s91, %s92
      %p106 = scmp.eq.s32.totalorder %s16, 3
      %p107 = por %p105, %p106
      %p109 = scmp.ne.s32.totalorder %s92, %s108
      %p110 = scmp.eq.s32.totalorder %s16, 0
      %p111 = por %p109, %p110
      %p112 = scmp.le.s32.totalorder 1, %s10
      %p113 = scmp.lt.s32.totalorder %s10, 5
      %p114 = pnand %p112, %p113
      %p115 = pneg %p114
      // Predicated region
      $region9: #{tpu_custom_call.1} parent=5 // pred_check
        _
      $region10: #{tpu_custom_call.1} parent=5 // pred_check_branch
        %117 = sbr.rel (%p114) target = $region12
      $region11: #{tpu_custom_call.1} parent=5 // pred_region
        %s118 = ssub.s32 %s10, 1
        // Predicated region
        $region13: #{tpu_custom_call.1} parent=11 // pred_check
          %p119 = pneg %p57
        $region14: #{tpu_custom_call.1} parent=11 // pred_check_branch
          %121 = sbr.rel (%p119) target = $region16
        $region15: #{tpu_custom_call.1} parent=11 // pred_region
          %123 = vsyncadd [#allocation3], 0
          %s124 = sshll.u32 %s1, 4
          %s125 = int_to_ptr.hbm [resolvable:$true] %s124
          %s126 = sshll.u32 [#allocation2], 4
          %s127 = int_to_ptr.vmem [resolvable:$true] %s126
          %132 = dma.hbm_to_vmem [thread:$0]  %s125, 8192, %s127, [#allocation3], 128, 128, 8
        $region16: #{tpu_custom_call.1} parent=11 // pred_fallthru
          _
        // Predicated region
        $region17: #{tpu_custom_call.1} parent=11 // pred_check
          %p133 = pneg %p78
        $region18: #{tpu_custom_call.1} parent=11 // pred_check_branch
          %135 = sbr.rel (%p133) target = $region20
        $region19: #{tpu_custom_call.1} parent=11 // pred_region
          _
        $region20: #{tpu_custom_call.1} parent=11 // pred_fallthru
          _
      $region12: #{tpu_custom_call.1} parent=5 // pred_fallthru
        _
      %p136 = scmp.lt.s32.totalorder %s10, 4
      // Predicated region
      $region21: #{tpu_custom_call.1} parent=5 // pred_check
        %p137 = pneg %p136
      $region22: #{tpu_custom_call.1} parent=5 // pred_check_branch
        %139 = sbr.rel (%p137) target = $region24
      $region23: #{tpu_custom_call.1} parent=5 // pred_region
        // Predicated region
        $region25: #{tpu_custom_call.1} parent=23 // pred_check
          %p140 = pneg %p30
        $region26: #{tpu_custom_call.1} parent=23 // pred_check_branch
          %142 = sbr.rel (%p140) target = $region28
        $region27: #{tpu_custom_call.1} parent=23 // pred_region
          %s143 = smul.u32 7, %s10
          %s144 = ssub.s32 25, %s143
          %p145 = scmp.lt.s32.totalorder %s144, 7
          %s146 = scalar_select %p145, %s144, 7
          %s147 = smul.u32 8, %s146
          %p148 = scmp.lt.s32.totalorder %s143, 24
          %s149 = scalar_select %p148, %s143, 24
          %s150 = smul.addr %s149, 8
          %s151 = scalar_lea.vmem %s0, %s150
          %s152 = smul.u32 7, %s10
          %s153 = ssub.s32 25, %s152
          %p154 = scmp.lt.s32.totalorder %s153, 7
          %s155 = scalar_select %p154, %s153, 7
          %s156 = smul.u32 8, %s155
        $region28: #{tpu_custom_call.1} parent=23 // pred_fallthru
          _
      $region24: #{tpu_custom_call.1} parent=5 // pred_fallthru
        _
      %p157 = scmp.le.s32.totalorder 1, %s10
      %p158 = scmp.lt.s32.totalorder %s10, 5
      %p159 = pnand %p157, %p158
      %p160 = pneg %p159
      // Predicated region
      $region29: #{tpu_custom_call.1} parent=5 // pred_check
        _
      $region30: #{tpu_custom_call.1} parent=5 // pred_check_branch
        %162 = sbr.rel (%p159) target = $region32
      $region31: #{tpu_custom_call.1} parent=5 // pred_region
        %s163 = ssub.s32 %s10, 1
        // Predicated region
        $region33: #{tpu_custom_call.1} parent=31 // pred_check
          %p164 = pneg %p57
        $region34: #{tpu_custom_call.1} parent=31 // pred_check_branch
          %166 = sbr.rel (%p164) target = $region36
        $region35: #{tpu_custom_call.1} parent=31 // pred_region
          %168 = dma.done [#allocation3], 8192
        $region36: #{tpu_custom_call.1} parent=31 // pred_fallthru
          _
        %s169 = smul.u32 7, %s15
        %s170 = ssub.s32 25, %s169
        %p171 = scmp.lt.s32.totalorder %s170, 7
        %s172 = scalar_select %p171, %s170, 7
        %s173 = smul.u32 8, %s172
        %p174 = scmp.lt.s32.totalorder %s169, 24
        %s175 = scalar_select %p174, %s169, 24
        %s176 = smul.addr %s175, 8
        %s177 = scalar_lea.vmem %s0, %s176
        %p178 = pneg %p36
        %p179 = pneg %p33
        %p180 = pneg %p57
        %p181 = pneg %p54
        %p182 = pneg %p78
        %p183 = pneg %p75
        %p184 = pneg %p104
        %p185 = pneg %p101
        %s186 = sand.u32 %s91, 1
        %s187 = sand.u32 %s91, 1
        %s188 = smul.addr %s187, 56
        %s189 = scalar_lea.vmem [#allocation4], %s188
        %s190 = smul.u32 7, %s15
        %s191 = ssub.s32 25, %s190
        %p192 = scmp.lt.s32.totalorder %s191, 7
        %s193 = scalar_select %p192, %s191, 7
        %s194 = smul.u32 8, %s193
        %p195 = scmp.lt.s32.totalorder %s190, 24
        %s196 = scalar_select %p195, %s190, 24
        %s197 = smul.addr %s196, 8
        %s198 = scalar_lea.vmem %s0, %s197
        %s199 = smul.u32 7, %s15
        %s200 = ssub.s32 25, %s199
        %p201 = scmp.lt.s32.totalorder %s200, 7
        %s202 = scalar_select %p201, %s200, 7
        %s203 = smul.u32 8, %s202
        %s204 = smul.u32 7, %s15
        %s205 = ssub.s32 25, %s204
        %p206 = scmp.lt.s32.totalorder %s205, 7
        %s207 = scalar_select %p206, %s205, 7
        %s208 = smul.u32 8, %s207
        %v209 = vld [vmem:[%s198] sm:$0xff]
        %v210 = vld [vmem:[%s198 + $0x8] sm:$0xff]
        %v211 = vld [vmem:[%s198 + $0x10] sm:$0xff]
        %v212 = vld [vmem:[%s198 + $0x18] sm:$0xff]
        %v213 = vld [vmem:[%s198 + $0x20] sm:$0xff]
        %v214 = vld [vmem:[%s198 + $0x28] sm:$0xff]
        %v215 = vld [vmem:[%s198 + $0x30] sm:$0xff]
        %v216 = vld [vmem:[#allocation2] sm:$0xff]
        %v217 = vld [vmem:[#allocation2 + $0x8] sm:$0xff]
        %v218 = vld [vmem:[#allocation2 + $0x10] sm:$0xff]
        %v219 = vld [vmem:[#allocation2 + $0x18] sm:$0xff]
        %v220 = vld [vmem:[%s2] sm:$0x1]
        %v221 = vperm.slane %v220, 0
        %vm222 = vcmask 261120
        %v224 = vsel %vm222, %v209, 0
        %v227 = vsel %vm222, %v210, 0
        %v230 = vsel %vm222, %v211, 0
        %v233 = vsel %vm222, %v212, 0
        %v236 = vsel %vm222, %v213, 0
        %v239 = vsel %vm222, %v214, 0
        %v242 = vsel %vm222, %v215, 0
        %244 = vmatpush.msra.mxu0 0.0
        %245 = vmatpush.msra.mxu0 0.0
        %246 = vmatpush.msra.mxu0 0.0
        %247 = vmatpush.msra.mxu0 0.0
        %248 = vmatpush.msra.mxu0 0.0
        %249 = vmatpush.msra.mxu0 0.0
        %250 = vmatpush.msra.mxu0 0.0
        %251 = vmatpush.msra.mxu0 0.0
        %252 = vmatpush.msra.mxu0 0.0
        %253 = vmatpush.msra.mxu0 0.0
        %254 = vmatpush.msra.mxu0 0.0
        %255 = vmatpush.msra.mxu0 0.0
        %256 = vmatpush.msra.mxu0 %v219
        %257 = vmatpush.msra.mxu0 %v218
        %258 = vmatpush.msra.mxu0 %v217
        %259 = vmatpush.msra.mxu0 %v216
        %260 = vmatmul.f32.gmra.mxu0 %v224
        %v261 = vpop.f32.mrf.mxu0
        %v262 = vadd.f32 %v221, %v261
        %263 = vmatmul.f32.gmra.mxu0 %v227
        %v264 = vpop.f32.mrf.mxu0
        %v265 = vadd.f32 %v221, %v264
        %266 = vmatmul.f32.gmra.mxu0 %v230
        %v267 = vpop.f32.mrf.mxu0
        %v268 = vadd.f32 %v221, %v267
        %269 = vmatmul.f32.gmra.mxu0 %v233
        %v270 = vpop.f32.mrf.mxu0
        %v271 = vadd.f32 %v221, %v270
        %272 = vmatmul.f32.gmra.mxu0 %v236
        %v273 = vpop.f32.mrf.mxu0
        %v274 = vadd.f32 %v221, %v273
        %275 = vmatmul.f32.gmra.mxu0 %v239
        %v276 = vpop.f32.mrf.mxu0
        %v277 = vadd.f32 %v221, %v276
        %278 = vmatmul.f32.gmra.mxu0 %v242
        %v279 = vpop.f32.mrf.mxu0
        %v280 = vadd.f32 %v221, %v279
        %281 = vdwg.mxu0
        %vm282 = vcmp.gt.f32.partialorder %v262, 0.0
        %vm283 = vcmp.gt.f32.partialorder %v265, 0.0
        %vm284 = vcmp.gt.f32.partialorder %v268, 0.0
        %vm285 = vcmp.gt.f32.partialorder %v271, 0.0
        %vm286 = vcmp.gt.f32.partialorder %v274, 0.0
        %vm287 = vcmp.gt.f32.partialorder %v277, 0.0
        %vm288 = vcmp.gt.f32.partialorder %v280, 0.0
        %v289 = vmul.f32 %v262, 0.2
        %v290 = vmul.f32 %v265, 0.2
        %v291 = vmul.f32 %v268, 0.2
        %v292 = vmul.f32 %v271, 0.2
        %v293 = vmul.f32 %v274, 0.2
        %v294 = vmul.f32 %v277, 0.2
        %v295 = vmul.f32 %v280, 0.2
        %v296 = vsel %vm282, %v262, %v289
        %v297 = vsel %vm283, %v265, %v290
        %v298 = vsel %vm284, %v268, %v291
        %v299 = vsel %vm285, %v271, %v292
        %v300 = vsel %vm286, %v274, %v293
        %v301 = vsel %vm287, %v277, %v294
        %v302 = vsel %vm288, %v280, %v295
        %s303 = scalar_lea.vmem [#allocation2], 128
        %v304 = vld [vmem:[%s303] sm:$0xff]
        %v305 = vld [vmem:[%s303 + $0x8] sm:$0xff]
        %v306 = vld [vmem:[%s303 + $0x10] sm:$0xff]
        %v307 = vld [vmem:[%s303 + $0x18] sm:$0xff]
        %v308 = vld [vmem:[%s303 + $0x20] sm:$0xff]
        %v309 = vld [vmem:[%s303 + $0x28] sm:$0xff]
        %v310 = vld [vmem:[%s303 + $0x30] sm:$0xff]
        %v311 = vld [vmem:[%s303 + $0x38] sm:$0xff]
        %v312 = vld [vmem:[%s303 + $0x40] sm:$0xff]
        %v313 = vld [vmem:[%s303 + $0x48] sm:$0xff]
        %v314 = vld [vmem:[%s303 + $0x50] sm:$0xff]
        %v315 = vld [vmem:[%s303 + $0x58] sm:$0xff]
        %v316 = vld [vmem:[%s303 + $0x60] sm:$0xff]
        %v317 = vld [vmem:[%s303 + $0x68] sm:$0xff]
        %v318 = vld [vmem:[%s303 + $0x70] sm:$0xff]
        %v319 = vld [vmem:[%s303 + $0x78] sm:$0xff]
        %v320 = vld [vmem:[%s2 + $0x1] sm:$0x1]
        %v321 = vperm.slane %v320, 0
        %322 = vmatpush.msra.mxu0 %v319
        %323 = vmatpush.msra.mxu0 %v318
        %324 = vmatpush.msra.mxu0 %v317
        %325 = vmatpush.msra.mxu0 %v316
        %326 = vmatpush.msra.mxu0 %v315
        %327 = vmatpush.msra.mxu0 %v314
        %328 = vmatpush.msra.mxu0 %v313
        %329 = vmatpush.msra.mxu0 %v312
        %330 = vmatpush.msra.mxu0 %v311
        %331 = vmatpush.msra.mxu0 %v310
        %332 = vmatpush.msra.mxu0 %v309
        %333 = vmatpush.msra.mxu0 %v308
        %334 = vmatpush.msra.mxu0 %v307
        %335 = vmatpush.msra.mxu0 %v306
        %336 = vmatpush.msra.mxu0 %v305
        %337 = vmatpush.msra.mxu0 %v304
        %338 = vmatmul.f32.gmra.mxu0 %v296
        %v339 = vpop.f32.mrf.mxu0
        %v340 = vadd.f32 %v321, %v339
        %341 = vmatmul.f32.gmra.mxu0 %v297
        %v342 = vpop.f32.mrf.mxu0
        %v343 = vadd.f32 %v321, %v342
        %344 = vmatmul.f32.gmra.mxu0 %v298
        %v345 = vpop.f32.mrf.mxu0
        %v346 = vadd.f32 %v321, %v345
        %347 = vmatmul.f32.gmra.mxu0 %v299
        %v348 = vpop.f32.mrf.mxu0
        %v349 = vadd.f32 %v321, %v348
        %350 = vmatmul.f32.gmra.mxu0 %v300
        %v351 = vpop.f32.mrf.mxu0
        %v352 = vadd.f32 %v321, %v351
        %353 = vmatmul.f32.gmra.mxu0 %v301
        %v354 = vpop.f32.mrf.mxu0
        %v355 = vadd.f32 %v321, %v354
        %356 = vmatmul.f32.gmra.mxu0 %v302
        %v357 = vpop.f32.mrf.mxu0
        %v358 = vadd.f32 %v321, %v357
        %359 = vdwg.mxu0
        %v360 = vmax.f32 %v340, 0.0
        %v361 = vmax.f32 %v343, 0.0
        %v362 = vmax.f32 %v346, 0.0
        %v363 = vmax.f32 %v349, 0.0
        %v364 = vmax.f32 %v352, 0.0
        %v365 = vmax.f32 %v355, 0.0
        %v366 = vmax.f32 %v358, 0.0
        %s367 = scalar_lea.vmem [#allocation2], 256
        %v368 = vld [vmem:[%s367] sm:$0xff]
        %v369 = vld [vmem:[%s367 + $0x8] sm:$0xff]
        %v370 = vld [vmem:[%s367 + $0x10] sm:$0xff]
        %v371 = vld [vmem:[%s367 + $0x18] sm:$0xff]
        %v372 = vld [vmem:[%s367 + $0x20] sm:$0xff]
        %v373 = vld [vmem:[%s367 + $0x28] sm:$0xff]
        %v374 = vld [vmem:[%s367 + $0x30] sm:$0xff]
        %v375 = vld [vmem:[%s367 + $0x38] sm:$0xff]
        %v376 = vld [vmem:[%s367 + $0x40] sm:$0xff]
        %v377 = vld [vmem:[%s367 + $0x48] sm:$0xff]
        %v378 = vld [vmem:[%s367 + $0x50] sm:$0xff]
        %v379 = vld [vmem:[%s367 + $0x58] sm:$0xff]
        %v380 = vld [vmem:[%s367 + $0x60] sm:$0xff]
        %v381 = vld [vmem:[%s367 + $0x68] sm:$0xff]
        %v382 = vld [vmem:[%s367 + $0x70] sm:$0xff]
        %v383 = vld [vmem:[%s367 + $0x78] sm:$0xff]
        %v384 = vld [vmem:[%s2 + $0x2] sm:$0x1]
        %v385 = vperm.slane %v384, 0
        %386 = vmatpush.msra.mxu0 %v383
        %387 = vmatpush.msra.mxu0 %v382
        %388 = vmatpush.msra.mxu0 %v381
        %389 = vmatpush.msra.mxu0 %v380
        %390 = vmatpush.msra.mxu0 %v379
        %391 = vmatpush.msra.mxu0 %v378
        %392 = vmatpush.msra.mxu0 %v377
        %393 = vmatpush.msra.mxu0 %v376
        %394 = vmatpush.msra.mxu0 %v375
        %395 = vmatpush.msra.mxu0 %v374
        %396 = vmatpush.msra.mxu0 %v373
        %397 = vmatpush.msra.mxu0 %v372
        %398 = vmatpush.msra.mxu0 %v371
        %399 = vmatpush.msra.mxu0 %v370
        %400 = vmatpush.msra.mxu0 %v369
        %401 = vmatpush.msra.mxu0 %v368
        %402 = vmatmul.f32.gmra.mxu0 %v360
        %v403 = vpop.f32.mrf.mxu0
        %v404 = vadd.f32 %v385, %v403
        %405 = vmatmul.f32.gmra.mxu0 %v361
        %v406 = vpop.f32.mrf.mxu0
        %v407 = vadd.f32 %v385, %v406
        %408 = vmatmul.f32.gmra.mxu0 %v362
        %v409 = vpop.f32.mrf.mxu0
        %v410 = vadd.f32 %v385, %v409
        %411 = vmatmul.f32.gmra.mxu0 %v363
        %v412 = vpop.f32.mrf.mxu0
        %v413 = vadd.f32 %v385, %v412
        %414 = vmatmul.f32.gmra.mxu0 %v364
        %v415 = vpop.f32.mrf.mxu0
        %v416 = vadd.f32 %v385, %v415
        %417 = vmatmul.f32.gmra.mxu0 %v365
        %v418 = vpop.f32.mrf.mxu0
        %v419 = vadd.f32 %v385, %v418
        %420 = vmatmul.f32.gmra.mxu0 %v366
        %v421 = vpop.f32.mrf.mxu0
        %v422 = vadd.f32 %v385, %v421
        %423 = vdwg.mxu0
        %v424 = vmax.f32 %v404, 0.0
        %v425 = vmax.f32 %v407, 0.0
        %v426 = vmax.f32 %v410, 0.0
        %v427 = vmax.f32 %v413, 0.0
        %v428 = vmax.f32 %v416, 0.0
        %v429 = vmax.f32 %v419, 0.0
        %v430 = vmax.f32 %v422, 0.0
        %s431 = scalar_lea.vmem [#allocation2], 384
        %v432 = vld [vmem:[%s431] sm:$0xff]
        %v433 = vld [vmem:[%s431 + $0x8] sm:$0xff]
        %v434 = vld [vmem:[%s431 + $0x10] sm:$0xff]
        %v435 = vld [vmem:[%s431 + $0x18] sm:$0xff]
        %v436 = vld [vmem:[%s431 + $0x20] sm:$0xff]
        %v437 = vld [vmem:[%s431 + $0x28] sm:$0xff]
        %v438 = vld [vmem:[%s431 + $0x30] sm:$0xff]
        %v439 = vld [vmem:[%s431 + $0x38] sm:$0xff]
        %v440 = vld [vmem:[%s431 + $0x40] sm:$0xff]
        %v441 = vld [vmem:[%s431 + $0x48] sm:$0xff]
        %v442 = vld [vmem:[%s431 + $0x50] sm:$0xff]
        %v443 = vld [vmem:[%s431 + $0x58] sm:$0xff]
        %v444 = vld [vmem:[%s431 + $0x60] sm:$0xff]
        %v445 = vld [vmem:[%s431 + $0x68] sm:$0xff]
        %v446 = vld [vmem:[%s431 + $0x70] sm:$0xff]
        %v447 = vld [vmem:[%s431 + $0x78] sm:$0xff]
        %v448 = vld [vmem:[%s2 + $0x3] sm:$0x1]
        %v449 = vperm.slane %v448, 0
        %450 = vmatpush.msra.mxu0 %v447
        %451 = vmatpush.msra.mxu0 %v446
        %452 = vmatpush.msra.mxu0 %v445
        %453 = vmatpush.msra.mxu0 %v444
        %454 = vmatpush.msra.mxu0 %v443
        %455 = vmatpush.msra.mxu0 %v442
        %456 = vmatpush.msra.mxu0 %v441
        %457 = vmatpush.msra.mxu0 %v440
        %458 = vmatpush.msra.mxu0 %v439
        %459 = vmatpush.msra.mxu0 %v438
        %460 = vmatpush.msra.mxu0 %v437
        %461 = vmatpush.msra.mxu0 %v436
        %462 = vmatpush.msra.mxu0 %v435
        %463 = vmatpush.msra.mxu0 %v434
        %464 = vmatpush.msra.mxu0 %v433
        %465 = vmatpush.msra.mxu0 %v432
        %466 = vmatmul.f32.gmra.mxu0 %v424
        %v467 = vpop.f32.mrf.mxu0
        %v468 = vadd.f32 %v449, %v467
        %469 = vmatmul.f32.gmra.mxu0 %v425
        %v470 = vpop.f32.mrf.mxu0
        %v471 = vadd.f32 %v449, %v470
        %472 = vmatmul.f32.gmra.mxu0 %v426
        %v473 = vpop.f32.mrf.mxu0
        %v474 = vadd.f32 %v449, %v473
        %475 = vmatmul.f32.gmra.mxu0 %v427
        %v476 = vpop.f32.mrf.mxu0
        %v477 = vadd.f32 %v449, %v476
        %478 = vmatmul.f32.gmra.mxu0 %v428
        %v479 = vpop.f32.mrf.mxu0
        %v480 = vadd.f32 %v449, %v479
        %481 = vmatmul.f32.gmra.mxu0 %v429
        %v482 = vpop.f32.mrf.mxu0
        %v483 = vadd.f32 %v449, %v482
        %484 = vmatmul.f32.gmra.mxu0 %v430
        %v485 = vpop.f32.mrf.mxu0
        %v486 = vadd.f32 %v449, %v485
        %487 = vdwg.mxu0
        %vm488 = vcmask 64512
        %489 = vst.msk [vmem:[%s189] sm:$0xff] %vm488, %v468
        %490 = vst.msk [vmem:[%s189 + $0x8] sm:$0xff] %vm488, %v471
        %491 = vst.msk [vmem:[%s189 + $0x10] sm:$0xff] %vm488, %v474
        %492 = vst.msk [vmem:[%s189 + $0x18] sm:$0xff] %vm488, %v477
        %493 = vst.msk [vmem:[%s189 + $0x20] sm:$0xff] %vm488, %v480
        %494 = vst.msk [vmem:[%s189 + $0x28] sm:$0xff] %vm488, %v483
        %495 = vst.msk [vmem:[%s189 + $0x30] sm:$0xff] %vm488, %v486
        %s496 = sand.u32 %s91, 1
        %s497 = sand.u32 %s91, 1
        %s498 = smul.addr %s497, 56
        %s499 = scalar_lea.vmem [#allocation4], %s498
        // Predicated region
        $region37: #{tpu_custom_call.1} parent=31 // pred_check
          %p500 = pneg %p101
        $region38: #{tpu_custom_call.1} parent=31 // pred_check_branch
          %502 = sbr.rel (%p500) target = $region40
        $region39: #{tpu_custom_call.1} parent=31 // pred_region
          %s503 = smul.u32 7, %s15
          %s504 = ssub.s32 25, %s503
          %p505 = scmp.lt.s32.totalorder %s504, 7
          %s506 = scalar_select %p505, %s504, 7
          %s507 = smul.u32 8, %s506
          %p508 = scmp.ne.s32.totalorder 0, %s507
          %s509 = smul.addr %s503, 8
          %s510 = scalar_lea.vmem %s3, %s509
          // Predicated region
          $region41: #{tpu_custom_call.1} parent=39 // pred_check
            %p511 = pneg %p508
          $region42: #{tpu_custom_call.1} parent=39 // pred_check_branch
            %513 = sbr.rel (%p511) target = $region44
          $region43: #{tpu_custom_call.1} parent=39 // pred_region
            // Predicated region
            $region45: #{tpu_custom_call.1} parent=43 // pred_check
              _
            $region46: #{tpu_custom_call.1} parent=43 // pred_check_branch
              %515 = sbr.rel (0) target = $region48
            $region47: #{tpu_custom_call.1} parent=43 // pred_region
              // Predicated region
              $region67: #{tpu_custom_call.1} parent=47 // pred_check
                _
              $region68: #{tpu_custom_call.1} parent=47 // pred_check_branch
                %578 = sbr.rel (0) target = $region70
              $region69: #{tpu_custom_call.1} parent=47 // pred_region
                %s579 = sdiv.u32.pop %s506, 7
                %s580 = srem.u32.pop %s506, 7
                // While loop
                $region71: #{tpu_custom_call.1} parent=69 // loop_pre_header
                  _
                $region72: #{tpu_custom_call.1} parent=69 // loop_header
                  %s582 = sphi 0, %s584
                  %p583 = scmp.ge.s32.totalorder %s582, %s579
                  %s587 = sphi 0, %s606
                  %s588 = sphi %s499, %s609
                  %s589 = sphi %s510, %s610
                $region73: #{tpu_custom_call.1} parent=69 // loop_header_branch
                  %586 = sbr.rel (%p583) target = $region77
                $region74: #{tpu_custom_call.1} parent=69 // loop_body
                  %v590 = vld [vmem:[%s588] sm:$0xff]
                  %591 = vst [vmem:[%s589] sm:$0xff] %v590
                  %v592 = vld [vmem:[%s588 + $0x8] sm:$0xff]
                  %593 = vst [vmem:[%s589 + $0x8] sm:$0xff] %v592
                  %v594 = vld [vmem:[%s588 + $0x10] sm:$0xff]
                  %595 = vst [vmem:[%s589 + $0x10] sm:$0xff] %v594
                  %v596 = vld [vmem:[%s588 + $0x18] sm:$0xff]
                  %597 = vst [vmem:[%s589 + $0x18] sm:$0xff] %v596
                  %v598 = vld [vmem:[%s588 + $0x20] sm:$0xff]
                  %599 = vst [vmem:[%s589 + $0x20] sm:$0xff] %v598
                  %v600 = vld [vmem:[%s588 + $0x28] sm:$0xff]
                  %601 = vst [vmem:[%s589 + $0x28] sm:$0xff] %v600
                  %v602 = vld [vmem:[%s588 + $0x30] sm:$0xff]
                  %603 = vst [vmem:[%s589 + $0x30] sm:$0xff] %v602
                  %s604 = sadd.s32 1, %s587
                  %p605 = scmp.ge.s32.totalorder %s604, %s579
                  %s606 = scalar_select %p605, 0, %s604
                  %s607 = smul.u32 %s606, 56
                  %s608 = smul.u32 %s606, 56
                  %s609 = scalar_lea.vmem %s499, %s607 [#allocation4]
                  %s610 = scalar_lea.vmem %s510, %s608
                $region75: #{tpu_custom_call.1} parent=69 // loop_footer
                  %s584 = sadd.s32 %s582, 1
                $region76: #{tpu_custom_call.1} parent=69 // loop_footer_branch
                  %581 = sbr.rel target = $region72
                $region77: #{tpu_custom_call.1} parent=69 // loop_exit
                  _
                %s611 = sdiv.u32.pop %s506, 7
                %s612 = srem.u32.pop %s506, 7
                %s613 = smul.u32 %s611, 7
                %s614 = smul.u32 8, %s613
                %s615 = scalar_lea.vmem %s499, %s614 [#allocation4]
                %s616 = smul.u32 8, %s613
                %s617 = scalar_lea.vmem %s510, %s616
                // While loop
                $region78: #{tpu_custom_call.1} parent=69 // loop_pre_header
                  _
                $region79: #{tpu_custom_call.1} parent=69 // loop_header
                  %s619 = sphi 0, %s621
                  %p620 = scmp.ge.s32.totalorder %s619, %s612
                  %s624 = sphi 0, %s631
                  %s625 = sphi %s615, %s634
                  %s626 = sphi %s617, %s635
                $region80: #{tpu_custom_call.1} parent=69 // loop_header_branch
                  %623 = sbr.rel (%p620) target = $region84
                $region81: #{tpu_custom_call.1} parent=69 // loop_body
                  %v627 = vld [vmem:[%s625] sm:$0xff]
                  %628 = vst [vmem:[%s626] sm:$0xff] %v627
                  %s629 = sadd.s32 1, %s624
                  %p630 = scmp.ge.s32.totalorder %s629, %s612
                  %s631 = scalar_select %p630, 0, %s629
                  %s632 = smul.u32 %s631, 8
                  %s633 = smul.u32 %s631, 8
                  %s634 = scalar_lea.vmem %s615, %s632 [#allocation4]
                  %s635 = scalar_lea.vmem %s617, %s633
                $region82: #{tpu_custom_call.1} parent=69 // loop_footer
                  %s621 = sadd.s32 %s619, 1
                $region83: #{tpu_custom_call.1} parent=69 // loop_footer_branch
                  %618 = sbr.rel target = $region79
                $region84: #{tpu_custom_call.1} parent=69 // loop_exit
                  _
              $region70: #{tpu_custom_call.1} parent=47 // pred_fallthru
                _
              // Predicated region
              $region85: #{tpu_custom_call.1} parent=47 // pred_check
                _
              $region86: #{tpu_custom_call.1} parent=47 // pred_check_branch
                %637 = sbr.rel target = $region88
              $region87: #{tpu_custom_call.1} parent=47 // pred_region
                _
              $region88: #{tpu_custom_call.1} parent=47 // pred_fallthru
                _
            $region48: #{tpu_custom_call.1} parent=43 // pred_fallthru
              _
            // Predicated region
            $region49: #{tpu_custom_call.1} parent=43 // pred_check
              _
            $region50: #{tpu_custom_call.1} parent=43 // pred_check_branch
              %517 = sbr.rel target = $region52
            $region51: #{tpu_custom_call.1} parent=43 // pred_region
              %s519 = ssub.s32 256, 1
              %s520 = sdiv.u32.pop %s506, 7
              %s521 = srem.u32.pop %s506, 7
              // While loop
              $region53: #{tpu_custom_call.1} parent=51 // loop_pre_header
                _
              $region54: #{tpu_custom_call.1} parent=51 // loop_header
                %s523 = sphi 0, %s525
                %p524 = scmp.ge.s32.totalorder %s523, %s520
                %s528 = sphi 0, %s547
                %s529 = sphi %s499, %s550
                %s530 = sphi %s510, %s551
              $region55: #{tpu_custom_call.1} parent=51 // loop_header_branch
                %527 = sbr.rel (%p524) target = $region59
              $region56: #{tpu_custom_call.1} parent=51 // loop_body
                %v531 = vld [vmem:[%s529] sm:%s519]
                %532 = vst [vmem:[%s530] sm:%s519] %v531
                %v533 = vld [vmem:[%s529 + $0x8] sm:%s519]
                %534 = vst [vmem:[%s530 + $0x8] sm:%s519] %v533
                %v535 = vld [vmem:[%s529 + $0x10] sm:%s519]
                %536 = vst [vmem:[%s530 + $0x10] sm:%s519] %v535
                %v537 = vld [vmem:[%s529 + $0x18] sm:%s519]
                %538 = vst [vmem:[%s530 + $0x18] sm:%s519] %v537
                %v539 = vld [vmem:[%s529 + $0x20] sm:%s519]
                %540 = vst [vmem:[%s530 + $0x20] sm:%s519] %v539
                %v541 = vld [vmem:[%s529 + $0x28] sm:%s519]
                %542 = vst [vmem:[%s530 + $0x28] sm:%s519] %v541
                %v543 = vld [vmem:[%s529 + $0x30] sm:%s519]
                %544 = vst [vmem:[%s530 + $0x30] sm:%s519] %v543
                %s545 = sadd.s32 1, %s528
                %p546 = scmp.ge.s32.totalorder %s545, %s520
                %s547 = scalar_select %p546, 0, %s545
                %s548 = smul.u32 %s547, 56
                %s549 = smul.u32 %s547, 56
                %s550 = scalar_lea.vmem %s499, %s548 [#allocation4]
                %s551 = scalar_lea.vmem %s510, %s549
              $region57: #{tpu_custom_call.1} parent=51 // loop_footer
                %s525 = sadd.s32 %s523, 1
              $region58: #{tpu_custom_call.1} parent=51 // loop_footer_branch
                %522 = sbr.rel target = $region54
              $region59: #{tpu_custom_call.1} parent=51 // loop_exit
                _
              %s552 = sdiv.u32.pop %s506, 7
              %s553 = srem.u32.pop %s506, 7
              %s554 = smul.u32 %s552, 7
              %s555 = smul.u32 8, %s554
              %s556 = scalar_lea.vmem %s499, %s555 [#allocation4]
              %s557 = smul.u32 8, %s554
              %s558 = scalar_lea.vmem %s510, %s557
              // While loop
              $region60: #{tpu_custom_call.1} parent=51 // loop_pre_header
                _
              $region61: #{tpu_custom_call.1} parent=51 // loop_header
                %s560 = sphi 0, %s562
                %p561 = scmp.ge.s32.totalorder %s560, %s553
                %s565 = sphi 0, %s572
                %s566 = sphi %s556, %s575
                %s567 = sphi %s558, %s576
              $region62: #{tpu_custom_call.1} parent=51 // loop_header_branch
                %564 = sbr.rel (%p561) target = $region66
              $region63: #{tpu_custom_call.1} parent=51 // loop_body
                %v568 = vld [vmem:[%s566] sm:%s519]
                %569 = vst [vmem:[%s567] sm:%s519] %v568
                %s570 = sadd.s32 1, %s565
                %p571 = scmp.ge.s32.totalorder %s570, %s553
                %s572 = scalar_select %p571, 0, %s570
                %s573 = smul.u32 %s572, 8
                %s574 = smul.u32 %s572, 8
                %s575 = scalar_lea.vmem %s556, %s573 [#allocation4]
                %s576 = scalar_lea.vmem %s558, %s574
              $region64: #{tpu_custom_call.1} parent=51 // loop_footer
                %s562 = sadd.s32 %s560, 1
              $region65: #{tpu_custom_call.1} parent=51 // loop_footer_branch
                %559 = sbr.rel target = $region61
              $region66: #{tpu_custom_call.1} parent=51 // loop_exit
                _
            $region52: #{tpu_custom_call.1} parent=43 // pred_fallthru
              _
          $region44: #{tpu_custom_call.1} parent=39 // pred_fallthru
            _
          %638 = vnop
        $region40: #{tpu_custom_call.1} parent=31 // pred_fallthru
          _
      $region32: #{tpu_custom_call.1} parent=5 // pred_fallthru
        _
      %p639 = scmp.le.s32.totalorder 2, %s10
      // Predicated region
      $region89: #{tpu_custom_call.1} parent=5 // pred_check
        %p640 = pneg %p639
      $region90: #{tpu_custom_call.1} parent=5 // pred_check_branch
        %642 = sbr.rel (%p640) target = $region92
      $region91: #{tpu_custom_call.1} parent=5 // pred_region
        %s643 = ssub.s32 %s10, 2
        // Predicated region
        $region93: #{tpu_custom_call.1} parent=91 // pred_check
          %p644 = pneg %p107
        $region94: #{tpu_custom_call.1} parent=91 // pred_check_branch
          %646 = sbr.rel (%p644) target = $region96
        $region95: #{tpu_custom_call.1} parent=91 // pred_region
          %s647 = sand.u32 %s92, 1
          %s648 = sand.u32 %s92, 1
          %s649 = smul.addr %s648, 56
          %s650 = scalar_lea.vmem [#allocation4], %s649
        $region96: #{tpu_custom_call.1} parent=91 // pred_fallthru
          _
      $region92: #{tpu_custom_call.1} parent=5 // pred_fallthru
        _
    $region6: #{tpu_custom_call.1} parent=1 // loop_footer
      %s14 = sadd.s32 1, %s10
    $region7: #{tpu_custom_call.1} parent=1 // loop_footer_branch
      %9 = sbr.rel target = $region3
    $region8: #{tpu_custom_call.1} parent=1 // loop_exit
      _
    %651 = vsyncpa [#allocation3], 1
    %s652 = scalar_lea.sflag [#allocation3], 1
    %653 = vsyncpa %s652, 1

</llo_original>
